<compile_context>
chip_gen: v5e
topology: v5e:2x2
jax: 0.10.0
libtpu: 0.0.40
codegen_flags: <defaults>
</compile_context>

<pallas_src>
import math
import functools

import jax
import jax.numpy as jnp
from jax.experimental import pallas as pl
from jax.experimental.pallas import tpu as pltpu


# --------------------------------------------------------------------------------------
# Kernels
# --------------------------------------------------------------------------------------
def _layernorm_kernel(x_ref, a_ref, b_ref, o_ref, *, eps: float):
    """Pre-norm. x_ref/o_ref: (TR, D) row tile; a_ref/b_ref: (1, D) params (broadcast)."""
    x = x_ref[...].astype(jnp.float32)                         # (TR, D)
    d = x.shape[-1]
    mean = jnp.mean(x, axis=-1, keepdims=True)                 # (TR, 1)
    xc = x - mean
    # torch.Tensor.std() uses Bessel's correction (divide by D-1), and the module
    # adds eps to *std*, not to the variance.
    var = jnp.sum(xc * xc, axis=-1, keepdims=True) * (1.0 / max(d - 1, 1))
    inv = 1.0 / (jnp.sqrt(var) + eps)
    y = a_ref[...].astype(jnp.float32) * (xc * inv) + b_ref[...].astype(jnp.float32)
    o_ref[...] = y.astype(o_ref.dtype)


def _residual_dropout_kernel(seed_ref, x_ref, s_ref, o_ref, *,
                             p_dropout: float, training: bool):
    """out = x + dropout(s). All refs are (TR, D) row tiles; seed_ref lives in SMEM."""
    x = x_ref[...]
    s = s_ref[...]
    if training and p_dropout > 0.0:
        # Inverted dropout, integer-threshold mask (keep prob = 1 - p).
        # Seed depends only on program_id -> results independent of grid interleaving.
        pltpu.prng_seed(seed_ref[0] + pl.program_id(0))
        bits = pltpu.bitcast(pltpu.prng_random_bits(s.shape), jnp.uint32)
        thr = jnp.asarray(min(int(round(p_dropout * (2 ** 32))), 2 ** 32 - 1),
                          dtype=jnp.uint32)
        keep = bits >= thr
        inv_keep = jnp.asarray(1.0 / (1.0 - p_dropout), dtype=s.dtype)
        s = jnp.where(keep, s * inv_keep, jnp.zeros_like(s))
    o_ref[...] = x + s


# --------------------------------------------------------------------------------------
# Wrappers
# --------------------------------------------------------------------------------------
def _row_tile(n_rows: int, d: int, itemsize: int, n_live_arrays: int,
              budget_bytes: int = 8 << 20) -> int:
    """Pick a row-tile size: multiple of 8, double-buffered footprint within budget.
    Budget is conservative for v7x's smaller (64 MiB physical / 32 MiB scoped) VMEM."""
    if n_rows <= 8:
        return n_rows                                   # full dim -> always legal
    per_row = n_live_arrays * 2 * d * itemsize          # x2 for double buffering
    tr = max(8, min(n_rows, budget_bytes // max(per_row, 1)))
    tr = max(8, (tr // 8) * 8)                          # (8, 128) sublane rule
    return min(tr, n_rows)


def _layernorm(x2, a_2, b_2, *, eps: float):
    R, D = x2.shape
    a2 = a_2.reshape(1, D).astype(x2.dtype)             # pre-cast: no in-kernel convert DMA
    b2 = b_2.reshape(1, D).astype(x2.dtype)
    TR = _row_tile(R, D, jnp.dtype(x2.dtype).itemsize, n_live_arrays=2)   # x + out
    grid = (pl.cdiv(R, TR),)
    return pl.pallas_call(
        functools.partial(_layernorm_kernel, eps=float(eps)),
        out_shape=jax.ShapeDtypeStruct((R, D), x2.dtype),
        grid_spec=pltpu.PrefetchScalarGridSpec(
            num_scalar_prefetch=0,
            grid=grid,
            in_specs=[pl.BlockSpec((TR, D), lambda i: (i, 0)),   # x row tile
                      pl.BlockSpec((1, D), lambda i: (0, 0)),    # a_2 (resident)
                      pl.BlockSpec((1, D), lambda i: (0, 0))],   # b_2 (resident)
            out_specs=pl.BlockSpec((TR, D), lambda i: (i, 0)),
        ),
        compiler_params=pltpu.CompilerParams(
            dimension_semantics=("parallel",),           # rows independent -> megacore OK
        ),
    )(x2, a2, b2)


def _residual_dropout(x2, s2, *, p_dropout: float, training: bool, seed: int):
    R, D = x2.shape
    TR = _row_tile(R, D, jnp.dtype(x2.dtype).itemsize, n_live_arrays=3)   # x, s, out
    grid = (pl.cdiv(R, TR),)
    seed_arr = jnp.asarray([seed], dtype=jnp.int32)
    kernel = functools.partial(_residual_dropout_kernel,
                               p_dropout=float(p_dropout), training=bool(training))
    return pl.pallas_call(
        kernel,
        out_shape=jax.ShapeDtypeStruct((R, D), x2.dtype),
        grid_spec=pltpu.PrefetchScalarGridSpec(
            num_scalar_prefetch=1,                       # dropout seed -> SMEM
            grid=grid,
            in_specs=[pl.BlockSpec((TR, D), lambda i, seed: (i, 0)),   # x
                      pl.BlockSpec((TR, D), lambda i, seed: (i, 0))],  # sublayer(norm(x))
            out_specs=pl.BlockSpec((TR, D), lambda i, seed: (i, 0)),
        ),
        compiler_params=pltpu.CompilerParams(
            dimension_semantics=("parallel",),           # seed is program_id-based -> safe
        ),
    )(seed_arr, x2, s2)


def sublayer_connection(x, a_2, b_2, sublayer_fn, *,
                        eps: float = 1e-6, p_dropout: float = 0.1,
                        training: bool = False, seed: int = 0):
    """Forward of SublayerConnection: x + dropout(sublayer(LayerNorm(x))).

    x: (..., D).  a_2, b_2: (D,) LayerNorm params.  sublayer_fn: any JAX callable
    mapping (..., D) -> (..., D)  (attention / FFN / identity / ...).
    """
    orig_shape = x.shape
    D = orig_shape[-1]
    R = math.prod(orig_shape[:-1]) if len(orig_shape) > 1 else 1
    x2 = x.reshape(R, D)

    h = _layernorm(x2, a_2, b_2, eps=eps)                           # Pallas kernel 1
    s = sublayer_fn(h.reshape(orig_shape)).reshape(R, D)            # user sublayer (plain JAX)
    out = _residual_dropout(x2, s, p_dropout=p_dropout,             # Pallas kernel 2
                            training=training, seed=seed)
    return out.reshape(orig_shape)


# --------------------------------------------------------------------------------------
# Self-test
# --------------------------------------------------------------------------------------
if __name__ == "__main__":
    # Small transformer-like shapes; D is a multiple of 128 so output stores are lane-dense.
    B, S, D = 2, 8, 128
    P_DROPOUT = 0.1
    EPS = 1e-6

    key = jax.random.PRNGKey(0)
    kx, kw = jax.random.split(key)
    x = jax.random.normal(kx, (B, S, D), dtype=jnp.float32)

    # LayerNorm params, initialized as in the PyTorch module (ones / zeros).
    a_2 = jnp.ones((D,), dtype=jnp.float32)
    b_2 = jnp.zeros((D,), dtype=jnp.float32)

    # A simple stand-in "sublayer": fixed linear map (same-size in/out, like attention/FFN).
    w = jax.random.normal(kw, (D, D), dtype=jnp.float32) * (1.0 / math.sqrt(D))
    sublayer_fn = lambda h: jnp.dot(h, w)

    # Eval-mode forward (nn.Dropout in eval mode is identity) -> deterministic, checkable.
    out = sublayer_connection(x, a_2, b_2, sublayer_fn,
                              eps=EPS, p_dropout=P_DROPOUT, training=False)
    out = jax.block_until_ready(out)

    # Pure-JAX reference matching the PyTorch math exactly (eval mode).
    def ref_layernorm(v):
        mean = v.mean(-1, keepdims=True)
        std = jnp.std(v, axis=-1, keepdims=True, ddof=1)   # torch .std() = Bessel-corrected
        return a_2 * (v - mean) / (std + EPS) + b_2

    ref = x + sublayer_fn(ref_layernorm(x))
    assert jnp.allclose(out, ref, atol=1e-5, rtol=1e-5), "mismatch vs reference"

    # Note: training-mode dropout (in-kernel TPU PRNG) is implemented above and runs on
    # real TPUs via training=True; it is intentionally not exercised here because the
    # CPU/interpret path has no lowering for prng_seed.
    print("KERNEL_OK")
</pallas_src>

<mosaic_0001>
module attributes {stable_mosaic.version = 11 : i64} {
  func.func @_layernorm_kernel(%arg0: i32, %arg1: memref<16x128xf32, #tpu.memory_space<vmem>>, %arg2: memref<1x128xf32, #tpu.memory_space<vmem>>, %arg3: memref<1x128xf32, #tpu.memory_space<vmem>>, %arg4: memref<16x128xf32, #tpu.memory_space<vmem>>) attributes {dimension_semantics = [#tpu.dimension_semantics<parallel>], iteration_bounds = array<i64: 1>, scalar_prefetch = 0 : i64, scratch_operands = 0 : i64, tpu.core_type = #tpu.core_type<tc>, window_params = [{transform_indices = @transform_0, window_bounds = array<i64: 16, 128>}, {pipeline_mode = #tpu.pipeline_mode<synchronous>, transform_indices = @transform_1, window_bounds = array<i64: 1, 128>}, {pipeline_mode = #tpu.pipeline_mode<synchronous>, transform_indices = @transform_2, window_bounds = array<i64: 1, 128>}, {transform_indices = @transform_3, window_bounds = array<i64: 16, 128>}]} {
    %c0 = arith.constant 0 : index
    %c0_0 = arith.constant 0 : index
    %0 = vector.load %arg1[%c0, %c0_0] : memref<16x128xf32, #tpu.memory_space<vmem>>, vector<16x128xf32>
    %cst = arith.constant dense<0.000000e+00> : vector<16xf32>
    %1 = vector.multi_reduction <add>, %0, %cst [1] : vector<16x128xf32> to vector<16xf32>
    %2 = vector.shape_cast %1 : vector<16xf32> to vector<16x1xf32>
    %cst_1 = arith.constant 1.280000e+02 : f32
    %3 = vector.broadcast %cst_1 : f32 to vector<16x1xf32>
    %4 = arith.divf %2, %3 : vector<16x1xf32>
    %5 = vector.broadcast %4 : vector<16x1xf32> to vector<16x128xf32>
    %6 = arith.subf %0, %5 : vector<16x128xf32>
    %7 = arith.mulf %6, %6 : vector<16x128xf32>
    %cst_2 = arith.constant dense<0.000000e+00> : vector<16xf32>
    %8 = vector.multi_reduction <add>, %7, %cst_2 [1] : vector<16x128xf32> to vector<16xf32>
    %9 = vector.shape_cast %8 : vector<16xf32> to vector<16x1xf32>
    %cst_3 = arith.constant 0.00787401571 : f32
    %10 = vector.broadcast %cst_3 : f32 to vector<16x1xf32>
    %11 = arith.mulf %9, %10 : vector<16x1xf32>
    %12 = math.sqrt %11 : vector<16x1xf32>
    %cst_4 = arith.constant 9.99999997E-7 : f32
    %13 = vector.broadcast %cst_4 : f32 to vector<16x1xf32>
    %14 = arith.addf %12, %13 : vector<16x1xf32>
    %cst_5 = arith.constant 1.000000e+00 : f32
    %15 = vector.broadcast %cst_5 : f32 to vector<16x1xf32>
    %16 = arith.divf %15, %14 : vector<16x1xf32>
    %c0_6 = arith.constant 0 : index
    %c0_7 = arith.constant 0 : index
    %17 = vector.load %arg2[%c0_6, %c0_7] : memref<1x128xf32, #tpu.memory_space<vmem>>, vector<1x128xf32>
    %18 = vector.broadcast %16 : vector<16x1xf32> to vector<16x128xf32>
    %19 = arith.mulf %6, %18 : vector<16x128xf32>
    %20 = vector.broadcast %17 : vector<1x128xf32> to vector<16x128xf32>
    %21 = arith.mulf %20, %19 : vector<16x128xf32>
    %c0_8 = arith.constant 0 : index
    %c0_9 = arith.constant 0 : index
    %22 = vector.load %arg3[%c0_8, %c0_9] : memref<1x128xf32, #tpu.memory_space<vmem>>, vector<1x128xf32>
    %23 = vector.broadcast %22 : vector<1x128xf32> to vector<16x128xf32>
    %24 = arith.addf %21, %23 : vector<16x128xf32>
    %c0_10 = arith.constant 0 : index
    %c0_11 = arith.constant 0 : index
    %25 = vector.load %arg4[%c0_10, %c0_11] : memref<16x128xf32, #tpu.memory_space<vmem>>, vector<16x128xf32>
    tpu.vector_store %arg4[%c0_10, %c0_11], %24 {strides = array<i32>} : memref<16x128xf32, #tpu.memory_space<vmem>>, vector<16x128xf32>,
    return
  }
  func.func @transform_0(%arg0: i32) -> (i32, i32) {
    %c0_i32 = arith.constant 0 : i32
    %c0_i32_0 = arith.constant 0 : i32
    return %arg0, %c0_i32 : i32, i32
  }
  func.func @transform_1(%arg0: i32) -> (i32, i32) {
    %c0_i32 = arith.constant 0 : i32
    %c0_i32_0 = arith.constant 0 : i32
    %c0_i32_1 = arith.constant 0 : i32
    return %c0_i32, %c0_i32_0 : i32, i32
  }
  func.func @transform_2(%arg0: i32) -> (i32, i32) {
    %c0_i32 = arith.constant 0 : i32
    %c0_i32_0 = arith.constant 0 : i32
    %c0_i32_1 = arith.constant 0 : i32
    return %c0_i32, %c0_i32_0 : i32, i32
  }
  func.func @transform_3(%arg0: i32) -> (i32, i32) {
    %c0_i32 = arith.constant 0 : i32
    %c0_i32_0 = arith.constant 0 : i32
    return %arg0, %c0_i32 : i32, i32
  }
}

</mosaic_0001>

<llo_original>
// kernel: tpu_custom_call.1
$region0: #{tpu_custom_call.1}
  #allocation0 [shape = 'u32[]', space=smem, size = 0x4, offset = 0x4, fixed_abs, tag = 'smem constant byte address 0x4 - core index']
  #allocation1 [shape = 'u32[72,128]{1,0:T(1,128)}', space=vmem, size = 0x9000, scoped, tag = 'internal scratch']
  %s0 = inlined_call_operand.hbm [shape: f32[16,128], index: 0, kind: input, shape index: {}]
  %s1 = inlined_call_operand.hbm [shape: f32[1,128], index: 1, kind: input, shape index: {}]
  %s2 = inlined_call_operand.vmem [shape: f32[1,128], index: 2, kind: input, shape index: {}]
  %s3 = inlined_call_operand.hbm [shape: f32[16,128], index: 3, kind: output, shape index: {}]
  %s4 = sld [smem:[#allocation0]]
  $region30: #{tpu_custom_call.1} parent=0
    _
  %s6 = ssub.s32 1, %s4
  %s7 = scalar_select 0, %s6, %s4
  $region1: #{tpu_custom_call.1} parent=0
    #allocation2 [shape = 'u8[8192]{0}', space=vmem, size = 0x2000, scoped, tag = 'input window, operand 0, single buffered']
    #allocation3 [shape = 's32[1]{0}', space=sflag, size = 0x4, scoped, tag = 'scoped memory for tpu_custom_call.1']
    #allocation4 [shape = 's32[1]{0}', space=sflag, size = 0x4, scoped, tag = 'scoped memory for tpu_custom_call.1']
    #allocation5 [shape = 'u8[512]{0}', space=vmem, size = 0x400, scoped, tag = 'input window, operand 1, single buffered']
    #allocation6 [shape = 's32[1]{0}', space=sflag, size = 0x4, scoped, tag = 'scoped memory for tpu_custom_call.1']
    #allocation7 [shape = 'u8[8192]{0}', space=vmem, size = 0x2000, scoped, tag = 'output window, operand 0, single buffered']
    %8 = vsyncpa [#allocation3], 0
    %9 = vsyncpa [#allocation6], 0
    %10 = vsyncpa [#allocation4], 0
    // Predicated region
    $region2: #{tpu_custom_call.1} parent=1 // pred_check
      _
    $region3: #{tpu_custom_call.1} parent=1 // pred_check_branch
      %12 = sbr.rel (0) target = $region5
    $region4: #{tpu_custom_call.1} parent=1 // pred_region
      %14 = vsyncadd [#allocation3], 0
      %s15 = sshll.u32 %s0, 4
      %s16 = int_to_ptr.hbm [resolvable:$true] %s15
      %s17 = sshll.u32 [#allocation2], 4
      %s18 = int_to_ptr.vmem [resolvable:$true] %s17
      %23 = dma.hbm_to_vmem [thread:$0]  %s16, 256, %s18, [#allocation3], 128, 128, 8
    $region5: #{tpu_custom_call.1} parent=1 // pred_fallthru
      _
    // Predicated region
    $region6: #{tpu_custom_call.1} parent=1 // pred_check
      _
    $region7: #{tpu_custom_call.1} parent=1 // pred_check_branch
      %25 = sbr.rel (0) target = $region9
    $region8: #{tpu_custom_call.1} parent=1 // pred_region
      %27 = vsyncadd [#allocation6], 0
      %s29 = sshll.u32 %s1, 4
      %s30 = int_to_ptr.hbm [resolvable:$true] %s29
      %s31 = sshll.u32 [#allocation5], 4
      %s32 = int_to_ptr.vmem [resolvable:$true] %s31
      %34 = dma.hbm_to_vmem [thread:$0]  %s30, 16, %s32, [#allocation6]
    $region9: #{tpu_custom_call.1} parent=1 // pred_fallthru
      _
    // Predicated region
    $region10: #{tpu_custom_call.1} parent=1 // pred_check
      _
    $region11: #{tpu_custom_call.1} parent=1 // pred_check_branch
      %36 = sbr.rel (0) target = $region13
    $region12: #{tpu_custom_call.1} parent=1 // pred_region
      _
    $region13: #{tpu_custom_call.1} parent=1 // pred_fallthru
      _
    // Predicated region
    $region14: #{tpu_custom_call.1} parent=1 // pred_check
      _
    $region15: #{tpu_custom_call.1} parent=1 // pred_check_branch
      %38 = sbr.rel (0) target = $region17
    $region16: #{tpu_custom_call.1} parent=1 // pred_region
      %40 = dma.done [#allocation3], 256
    $region17: #{tpu_custom_call.1} parent=1 // pred_fallthru
      _
    // Predicated region
    $region18: #{tpu_custom_call.1} parent=1 // pred_check
      _
    $region19: #{tpu_custom_call.1} parent=1 // pred_check_branch
      %42 = sbr.rel (0) target = $region21
    $region20: #{tpu_custom_call.1} parent=1 // pred_region
      %44 = dma.done [#allocation6], 16
    $region21: #{tpu_custom_call.1} parent=1 // pred_fallthru
      _
    %v45 = vld [vmem:[#allocation2] sm:$0xff]
    %v46 = vld [vmem:[#allocation2 + $0x8] sm:$0xff]
    %47 = vadd.xlane.f32.xlu0 %v45
    %v48 = vpop.xlane.xlu0 %47
    %49 = vadd.xlane.f32.xlu0 %v46
    %v50 = vpop.xlane.xlu0 %49
    %v51 = vrcp.pop 128.0
    %v52 = vmul.f32 128.0, %v51
    %v53 = vsub.f32 1.0, %v52
    %v54 = vmul.f32 %v51, %v53
    %v55 = vadd.f32 %v51, %v54
    %vm56 = vweird.f32 %v51
    %v57 = vsel %vm56, %v51, %v55
    %v58 = vmul.f32 %v48, %v57
    %v59 = vmul.f32 %v50, %v57
    %v60 = vsub.f32 %v45, %v58
    %v61 = vsub.f32 %v46, %v59
    %v62 = vmul.f32 %v60, %v60
    %v63 = vmul.f32 %v61, %v61
    %64 = vadd.xlane.f32.xlu0 %v62
    %v65 = vpop.xlane.xlu0 %64
    %66 = vadd.xlane.f32.xlu0 %v63
    %v67 = vpop.xlane.xlu0 %66
    %v68 = vmul.f32 %v65, 0.007874016
    %v69 = vmul.f32 %v67, 0.007874016
    %v70 = vrsqrt.pop %v68
    %v71 = vmul.f32 %v70, %v68
    %v72 = vmul.f32 %v71, %v70
    %v73 = vmul.f32 0.5, %v72
    %v74 = vsub.f32 1.5, %v73
    %v75 = vmul.f32 %v70, %v74
    %v76 = vmul.f32 %v68, %v75
    %vm77 = vcmp.eq.f32.partialorder %v68, inf
    %v78 = vsel %vm77, %v68, %v76
    %vm79 = vcmp.eq.f32.partialorder %v68, 0.0
    %v80 = vand.u32 %v68, 2147483648
    %v81 = vsel %vm79, %v80, %v78
    %v82 = vrsqrt.pop %v69
    %v83 = vmul.f32 %v82, %v69
    %v84 = vmul.f32 %v83, %v82
    %v85 = vmul.f32 0.5, %v84
    %v86 = vsub.f32 1.5, %v85
    %v87 = vmul.f32 %v82, %v86
    %v88 = vmul.f32 %v69, %v87
    %vm89 = vcmp.eq.f32.partialorder %v69, inf
    %v90 = vsel %vm89, %v69, %v88
    %vm91 = vcmp.eq.f32.partialorder %v69, 0.0
    %v92 = vand.u32 %v69, 2147483648
    %v93 = vsel %vm91, %v92, %v90
    %v94 = vadd.f32 %v81, 1e-06
    %v95 = vadd.f32 %v93, 1e-06
    %v96 = vrcp.pop %v94
    %v97 = vmul.f32 %v94, %v96
    %v98 = vsub.f32 1.0, %v97
    %v99 = vmul.f32 %v96, %v98
    %v100 = vadd.f32 %v96, %v99
    %vm101 = vweird.f32 %v94
    %vm102 = vweird.f32 %v96
    %vm103 = vmor %vm101, %vm102
    %v104 = vsel %vm103, %v96, %v100
    %v105 = vand.u32 2147483647, %v94
    %vm106 = vcmp.eq.f32.partialorder %v105, 8.507059e+37
    %v107 = vand.u32 %v94, 2147483648
    %v108 = vor.u32 1.1754944e-38, %v107
    %v109 = vsel %vm106, %v108, %v104
    %v110 = vmul.f32 1.0, %v109
    %v111 = vrcp.pop %v95
    %v112 = vmul.f32 %v95, %v111
    %v113 = vsub.f32 1.0, %v112
    %v114 = vmul.f32 %v111, %v113
    %v115 = vadd.f32 %v111, %v114
    %vm116 = vweird.f32 %v95
    %vm117 = vweird.f32 %v111
    %vm118 = vmor %vm116, %vm117
    %v119 = vsel %vm118, %v111, %v115
    %v120 = vand.u32 2147483647, %v95
    %vm121 = vcmp.eq.f32.partialorder %v120, 8.507059e+37
    %v122 = vand.u32 %v95, 2147483648
    %v123 = vor.u32 1.1754944e-38, %v122
    %v124 = vsel %vm121, %v123, %v119
    %v125 = vmul.f32 1.0, %v124
    %v126 = vld [vmem:[#allocation5] sm:$0x1]
    %v127 = vmul.f32 %v60, %v110
    %v128 = vmul.f32 %v61, %v125
    %v130 = vperm.slane %v126, 0
    %v132 = vmul.f32 %v130, %v127
    %v133 = vmul.f32 %v130, %v128
    %v134 = vld [vmem:[%s2] sm:$0x1]
    %v136 = vperm.slane %v134, 0
    %v138 = vadd.f32 %v132, %v136
    %v139 = vadd.f32 %v133, %v136
    %140 = vst [vmem:[#allocation7] sm:$0xff] %v138
    %141 = vst [vmem:[#allocation7 + $0x8] sm:$0xff] %v139
    // Predicated region
    $region22: #{tpu_custom_call.1} parent=1 // pred_check
      _
    $region23: #{tpu_custom_call.1} parent=1 // pred_check_branch
      %143 = sbr.rel (0) target = $region25
    $region24: #{tpu_custom_call.1} parent=1 // pred_region
      %145 = vsyncadd [#allocation4], 0
      %s146 = sshll.u32 [#allocation7], 4
      %s147 = int_to_ptr.vmem [resolvable:$true] %s146
      %s148 = sshll.u32 %s3, 4
      %s149 = int_to_ptr.hbm [resolvable:$true] %s148
      %154 = dma.vmem_to_hbm [thread:$0]  %s147, 256, %s149, [#allocation4], 128, 128, 8
    $region25: #{tpu_custom_call.1} parent=1 // pred_fallthru
      _
    // Predicated region
    $region26: #{tpu_custom_call.1} parent=1 // pred_check
      _
    $region27: #{tpu_custom_call.1} parent=1 // pred_check_branch
      %156 = sbr.rel (0) target = $region29
    $region28: #{tpu_custom_call.1} parent=1 // pred_region
      %158 = dma.done [#allocation4], 256
    $region29: #{tpu_custom_call.1} parent=1 // pred_fallthru
      _
    %159 = vsyncpa [#allocation3], 1
    %160 = vsyncpa [#allocation6], 1
    %161 = vsyncpa [#allocation4], 1

</llo_original>
